<compile_context>
chip_gen: v6e
topology: v6e:2x2x1
jax: 0.10.0
libtpu: 0.0.40
codegen_flags: <defaults>
</compile_context>

<pallas_src>
import math
import functools
import numpy as np
import jax
import jax.numpy as jnp
from jax.experimental import pallas as pl
from jax.experimental.pallas import tpu as pltpu


PAD = 128             # lane-dense padded width for all feature/weight/output slabs
NODE_SLOT = PAD // 2  # one-hot lanes 0..63 encode the subject node, 64..127 the object


# ----------------------------------------------------------------------------
# Pallas kernel: fused RelCls forward for one (edge-type, edge-tile) block
# ----------------------------------------------------------------------------
def relcls_kernel(idx_ref, tab_ref, w_ref, b_ref, out_ref, *, hidden):
    # idx_ref: [tile_e, 2]   int32  columns = (sub_idx, obj_idx + NODE_SLOT)
    # tab_ref: [PAD, PAD]    bf16   node table:
    #            rows 0..63   : [node_feat | 0         | descriptor | 0         ]
    #            rows 64..127 : [0         | node_feat | 0          | descriptor]
    # w_ref:   [3, PAD, PAD] bf16   [proj block-diag, w1 pad, (w2 @ w3) pad]
    # b_ref:   [3, PAD]      f32    [proj bias, b1 pad, (b2 @ w3 + b3) pad]
    # out_ref: [tile_e, PAD] bf16   (only first num_classes lanes are live)
    H = hidden

    # ---- in-kernel gather: one-hot(sub)|one-hot(obj) -> one MXU pass ---------
    idx = idx_ref[...]                                           # [tile_e, 2]
    tile_e = idx.shape[0]
    lanes = jax.lax.broadcasted_iota(jnp.int32, (tile_e, PAD), 1)
    hit = (lanes == idx[:, 0:1]) | (lanes == idx[:, 1:2])
    onehot = jnp.where(hit, 1.0, 0.0).astype(jnp.bfloat16)       # [tile_e, PAD]
    # x = [sub_feat | obj_feat | sub_desc | obj_desc]  (= [geo | ngeo])
    x = jnp.dot(onehot, tab_ref[...],
                preferred_element_type=jnp.float32).astype(jnp.bfloat16)

    # ---- fused projection: block-diagonal matmul -> [origin|query|key|value] -
    proj = jnp.dot(x, w_ref[0], preferred_element_type=jnp.float32) + b_ref[0:1, :]
    origin = proj[:, 0:H]
    query = proj[:, H:2 * H]
    key = proj[:, 2 * H:3 * H]
    value = proj[:, 3 * H:4 * H]

    # attention_compute: softmax(query * key, dim=1) (row-wise over hidden dim)
    logits = query * key
    m = jnp.max(logits, axis=1, keepdims=True)
    e = jnp.exp(logits - m)
    alpha = e * pl.reciprocal(jnp.sum(e, axis=1, keepdims=True), approx=True)

    # fusion_edge_feature = value * alpha + origin_node_feat
    fused = (value * alpha + origin).astype(jnp.bfloat16)        # [tile_e, H]

    # classifier: Linear(H,H/2) -> ReLU -> folded(Linear(H/2,H/4); Linear(H/4,C))
    w1 = w_ref[1][:H, :]                                         # [H, PAD]
    h1 = jnp.dot(fused, w1, preferred_element_type=jnp.float32) + b_ref[1:2, :]
    h1 = jnp.maximum(h1, 0.0).astype(jnp.bfloat16)               # [tile_e, PAD]
    out = jnp.dot(h1, w_ref[2], preferred_element_type=jnp.float32) + b_ref[2:3, :]

    out_ref[...] = out.astype(out_ref.dtype)


def relcls_forward(idx_all, node_table, w_all, b_all, hidden, *, tile_e=None):
    """idx_all: [T,E,2] int32, node_table: [PAD,PAD] bf16,
       w_all: [T,3,PAD,PAD] bf16, b_all: [T,3,PAD] f32 -> [T,E,PAD] bf16."""
    T, E, _ = idx_all.shape
    P = w_all.shape[-1]
    if tile_e is None:
        tile_e = E if E <= 2048 else 2048      # big tiles amortize per-step overhead
    assert E % tile_e == 0
    assert tile_e == E or tile_e % 8 == 0

    kernel = functools.partial(relcls_kernel, hidden=hidden)
    return pl.pallas_call(
        kernel,
        out_shape=jax.ShapeDtypeStruct((T, E, P), jnp.bfloat16),
        grid=(T, E // tile_e),
        in_specs=[
            pl.BlockSpec((None, tile_e, 2), lambda t, i: (t, i, 0)),
            pl.BlockSpec((P, P), lambda t, i: (0, 0)),          # node table, shared
            pl.BlockSpec((None, 3, P, P), lambda t, i: (t, 0, 0, 0)),
            pl.BlockSpec((None, 3, P), lambda t, i: (t, 0, 0)),
        ],
        out_specs=pl.BlockSpec((None, tile_e, P), lambda t, i: (t, i, 0)),
        compiler_params=pltpu.CompilerParams(
            dimension_semantics=("parallel", "parallel")),
    )(idx_all, node_table, w_all, b_all)


# ----------------------------------------------------------------------------
# Parameter construction (deterministic, synthetic) + packing
# ----------------------------------------------------------------------------
def make_linear(key, fan_in, fan_out):
    kw, kb = jax.random.split(key)
    scale = 1.0 / math.sqrt(fan_in)
    w = jax.random.uniform(kw, (fan_in, fan_out), jnp.float32, -scale, scale)
    b = jax.random.uniform(kb, (1, fan_out), jnp.float32, -scale, scale)
    return w, b


def make_reltype_params(key, hidden, num_classes):
    keys = jax.random.split(key, 7)
    we, be = make_linear(keys[0], 2 * hidden, hidden)        # edge_lin
    wq, bq = make_linear(keys[1], 2 * hidden, hidden)        # q_lin
    wk, bk = make_linear(keys[2], 2 * hidden, hidden)        # k_lin
    wv, bv = make_linear(keys[3], 2 * hidden, hidden)        # v_lin
    w1, b1 = make_linear(keys[4], hidden, hidden // 2)       # classifier L1
    w2, b2 = make_linear(keys[5], hidden // 2, hidden // 4)  # classifier L2
    w3, b3 = make_linear(keys[6], hidden // 4, num_classes)  # classifier L3
    return (we, be, wq, bq, wk, bk, wv, bv, w1, b1, w2, b2, w3, b3)


def pack_type_params(params, hidden, num_classes):
    """Pack the 14 per-type tensors into one weight slab and one bias slab."""
    (we, be, wq, bq, wk, bk, wv, bv, w1, b1, w2, b2, w3, b3) = params
    H = hidden
    h2_ = H // 2
    assert 4 * H <= PAD

    # block-diagonal fused projection weight: [geo|ngeo] @ wproj = [o|q|k|v]
    wproj = jnp.zeros((PAD, PAD), jnp.float32)
    wproj = wproj.at[0:2 * H, 0:H].set(we)
    wproj = wproj.at[0:2 * H, H:2 * H].set(wq)
    wproj = wproj.at[2 * H:4 * H, 2 * H:3 * H].set(wk)
    wproj = wproj.at[2 * H:4 * H, 3 * H:4 * H].set(wv)

    # classifier L2/L3 folded in f32 (no nonlinearity between them)
    w23 = w2 @ w3                      # [H/2, C]
    b23 = b2 @ w3 + b3                 # [1, C]

    w1p = jnp.zeros((PAD, PAD), jnp.float32).at[0:H, 0:h2_].set(w1)
    w23p = jnp.zeros((PAD, PAD), jnp.float32).at[0:h2_, 0:num_classes].set(w23)
    wpack = jnp.stack([wproj, w1p, w23p], axis=0).astype(jnp.bfloat16)

    bpack = jnp.zeros((3, PAD), jnp.float32)
    bpack = bpack.at[0, 0:H].set(be[0])
    bpack = bpack.at[0, H:2 * H].set(bq[0])
    bpack = bpack.at[0, 2 * H:3 * H].set(bk[0])
    bpack = bpack.at[0, 3 * H:4 * H].set(bv[0])
    bpack = bpack.at[1, 0:h2_].set(b1[0])
    bpack = bpack.at[2, 0:num_classes].set(b23[0])
    return wpack, bpack


def build_node_table(node_feat, descriptor, hidden):
    """Pack node features + descriptors into the [PAD,PAD] in-kernel gather table."""
    n_nodes, H = node_feat.shape
    assert H == hidden and 4 * H <= PAD
    assert n_nodes <= NODE_SLOT
    # TODO(synk): for graphs with > 64 nodes, chunk the one-hot gather over node
    # tiles (multiple MXU passes) or fall back to a DMA gather.
    tab = jnp.zeros((PAD, PAD), jnp.float32)
    tab = tab.at[0:n_nodes, 0:H].set(node_feat)                               # sub geo
    tab = tab.at[0:n_nodes, 2 * H:3 * H].set(descriptor)                      # sub non-geo
    tab = tab.at[NODE_SLOT:NODE_SLOT + n_nodes, H:2 * H].set(node_feat)       # obj geo
    tab = tab.at[NODE_SLOT:NODE_SLOT + n_nodes, 3 * H:4 * H].set(descriptor)  # obj non-geo
    return tab.astype(jnp.bfloat16)


# ----------------------------------------------------------------------------
# Glue: genearte_edge_feature equivalent (only used for the reference check)
# ----------------------------------------------------------------------------
def generate_edge_features(node_feat, descriptor, sub_idx, obj_idx):
    sub_f = jnp.take(node_feat, sub_idx, axis=0)
    obj_f = jnp.take(node_feat, obj_idx, axis=0)
    sub_d = jnp.take(descriptor, sub_idx, axis=0)
    obj_d = jnp.take(descriptor, obj_idx, axis=0)
    geo = jnp.concatenate([sub_f, obj_f], axis=1)            # [E, 2H]
    non_geo = jnp.concatenate([sub_d, obj_d], axis=1)        # [E, 2H]
    return geo, non_geo


# ----------------------------------------------------------------------------
# Pure-JAX reference (original module structure; bf16-quantized weights/activations)
# ----------------------------------------------------------------------------
def relcls_reference(geo, ngeo, params):
    def q(a):
        return a.astype(jnp.bfloat16).astype(jnp.float32)
    (we, be, wq, bq, wk, bk, wv, bv, w1, b1, w2, b2, w3, b3) = params
    g, ng = q(geo), q(ngeo)
    origin = g @ q(we) + be
    query = g @ q(wq) + bq
    key = ng @ q(wk) + bk
    value = ng @ q(wv) + bv
    alpha = jax.nn.softmax(query * key, axis=1)
    fused = q(value * alpha + origin)
    h1 = q(jnp.maximum(fused @ q(w1) + b1, 0.0))
    h2 = h1 @ q(w2) + b2
    return h2 @ q(w3) + b3


# ----------------------------------------------------------------------------
# Main
# ----------------------------------------------------------------------------
if __name__ == "__main__":
    hidden = 32          # config.MODEL.gcn_hidden_feature_size
    n_nodes = 16
    n_edges = 64

    # synthetic prior_knowledge: two edge types with different class counts
    prior_knowledge = {
        "edgeType": {
            "spatial": ["left", "right", "front", "back", "near", "far", "none"],  # 7
            "support": ["on", "under", "in", "none"],                               # 4
        }
    }

    root = jax.random.PRNGKey(0)
    k_nodes, k_desc, k_edges, k_params = jax.random.split(root, 4)

    node_feat = jax.random.normal(k_nodes, (n_nodes, hidden), jnp.float32)
    descriptor = jax.random.normal(k_desc, (n_nodes, hidden), jnp.float32)

    edge_types = list(prior_knowledge["edgeType"].keys())
    T = len(edge_types)
    param_keys = jax.random.split(k_params, T)
    edge_keys = jax.random.split(k_edges, 2 * T)

    node_table = build_node_table(node_feat, descriptor, hidden)   # [128,128] bf16

    idxs, wpacks, bpacks, raw = [], [], [], []
    for ti, edge_type in enumerate(edge_types):
        num_classes = len(prior_knowledge["edgeType"][edge_type])
        params = make_reltype_params(param_keys[ti], hidden, num_classes)

        sub_idx = jax.random.randint(edge_keys[2 * ti], (n_edges,), 0, n_nodes)
        obj_idx = jax.random.randint(edge_keys[2 * ti + 1], (n_edges,), 0, n_nodes)
        # pre-offset the object index so the kernel only does two lane compares
        idxs.append(jnp.stack([sub_idx, obj_idx + NODE_SLOT], axis=1).astype(jnp.int32))

        wp, bp = pack_type_params(params, hidden, num_classes)
        wpacks.append(wp)
        bpacks.append(bp)
        raw.append((params, sub_idx, obj_idx, num_classes))

    # Batch all edge types into one pallas_call (equal edge counts here;
    # in general pad each type's edge list to a common E before stacking).
    idx_all = jnp.stack(idxs, axis=0)                        # [T, E, 2] int32
    w_all = jnp.stack(wpacks, axis=0)                        # [T, 3, 128, 128] bf16
    b_all = jnp.stack(bpacks, axis=0)                        # [T, 3, 128] f32

    out_all = relcls_forward(idx_all, node_table, w_all, b_all, hidden)
    out_all = jax.block_until_ready(out_all)

    ok = True
    out_dict = {}
    for ti, edge_type in enumerate(edge_types):
        params, sub_idx, obj_idx, num_classes = raw[ti]
        out = out_all[ti, :, :num_classes].astype(jnp.float32)   # strip lane padding
        out_dict[edge_type] = out
        geo, ngeo = generate_edge_features(node_feat, descriptor, sub_idx, obj_idx)
        ref = relcls_reference(geo, ngeo, params)
        ok = ok and bool(np.allclose(np.asarray(out), np.asarray(ref),
                                     atol=3e-2, rtol=3e-2))

    print("KERNEL_OK" if ok else "KERNEL_MISMATCH")
</pallas_src>

<mosaic_0001>
module attributes {stable_mosaic.version = 11 : i64} {
  func.func @relcls_kernel(%arg0: i32, %arg1: i32, %arg2: memref<1x64x2xi32, #tpu.memory_space<vmem>>, %arg3: memref<128x128xbf16, #tpu.memory_space<vmem>>, %arg4: memref<1x3x128x128xbf16, #tpu.memory_space<vmem>>, %arg5: memref<1x3x128xf32, #tpu.memory_space<vmem>>, %arg6: memref<1x64x128xbf16, #tpu.memory_space<vmem>>) attributes {dimension_semantics = [#tpu.dimension_semantics<parallel>, #tpu.dimension_semantics<parallel>], iteration_bounds = array<i64: 2, 1>, scalar_prefetch = 0 : i64, scratch_operands = 0 : i64, tpu.core_type = #tpu.core_type<tc>, window_params = [{transform_indices = @transform_0, window_bounds = array<i64: 1, 64, 2>}, {pipeline_mode = #tpu.pipeline_mode<synchronous>, transform_indices = @transform_1, window_bounds = array<i64: 128, 128>}, {transform_indices = @transform_2, window_bounds = array<i64: 1, 3, 128, 128>}, {transform_indices = @transform_3, window_bounds = array<i64: 1, 3, 128>}, {transform_indices = @transform_4, window_bounds = array<i64: 1, 64, 128>}]} {
    %c0 = arith.constant 0 : index
    %c0_0 = arith.constant 0 : index
    %c0_1 = arith.constant 0 : index
    %0 = vector.load %arg2[%c0, %c0_0, %c0_1] : memref<1x64x2xi32, #tpu.memory_space<vmem>>, vector<1x64x2xi32>
    %1 = vector.shape_cast %0 : vector<1x64x2xi32> to vector<64x2xi32>
    %2 = tpu.iota {dimensions = array<i32: 1>} : vector<64x128xi32>
    %3 = vector.extract_strided_slice %1 {offsets = [0, 0], sizes = [64, 1], strides = [1, 1]} : vector<64x2xi32> to vector<64x1xi32>
    %4 = vector.broadcast %3 : vector<64x1xi32> to vector<64x128xi32>
    %5 = arith.cmpi eq, %2, %4 : vector<64x128xi32>
    %6 = vector.extract_strided_slice %1 {offsets = [0, 1], sizes = [64, 1], strides = [1, 1]} : vector<64x2xi32> to vector<64x1xi32>
    %7 = vector.broadcast %6 : vector<64x1xi32> to vector<64x128xi32>
    %8 = arith.cmpi eq, %2, %7 : vector<64x128xi32>
    %9 = arith.ori %5, %8 : vector<64x128xi1>
    %cst = arith.constant 1.000000e+00 : f32
    %cst_2 = arith.constant 0.000000e+00 : f32
    %10 = vector.broadcast %cst : f32 to vector<64x128xf32>
    %11 = vector.broadcast %cst_2 : f32 to vector<64x128xf32>
    %12 = arith.select %9, %10, %11 : vector<64x128xi1>, vector<64x128xf32>
    %13 = arith.truncf %12 : vector<64x128xf32> to vector<64x128xbf16>
    %c0_3 = arith.constant 0 : index
    %c0_4 = arith.constant 0 : index
    %14 = vector.load %arg3[%c0_3, %c0_4] : memref<128x128xbf16, #tpu.memory_space<vmem>>, vector<128x128xbf16>
    %cst_5 = arith.constant dense<0.000000e+00> : vector<64x128xf32>
    %15 = tpu.matmul %13, %14, %cst_5 {dimension_numbers = #tpu.dot_dimension_numbers<[1], [0], [0], [1], [0, 0, 1, 1], [], []>} : vector<64x128xbf16>, vector<128x128xbf16>, vector<64x128xf32> -> vector<64x128xf32>
    %16 = arith.truncf %15 : vector<64x128xf32> to vector<64x128xbf16>
    %c0_6 = arith.constant 0 : index
    %c0_7 = arith.constant 0 : index
    %c0_8 = arith.constant 0 : index
    %c0_9 = arith.constant 0 : index
    %17 = vector.load %arg4[%c0_6, %c0_7, %c0_8, %c0_9] : memref<1x3x128x128xbf16, #tpu.memory_space<vmem>>, vector<1x1x128x128xbf16>
    %18 = vector.shape_cast %17 : vector<1x1x128x128xbf16> to vector<128x128xbf16>
    %cst_10 = arith.constant dense<0.000000e+00> : vector<64x128xf32>
    %19 = tpu.matmul %16, %18, %cst_10 {dimension_numbers = #tpu.dot_dimension_numbers<[1], [0], [0], [1], [0, 0, 1, 1], [], []>} : vector<64x128xbf16>, vector<128x128xbf16>, vector<64x128xf32> -> vector<64x128xf32>
    %c0_11 = arith.constant 0 : index
    %c0_12 = arith.constant 0 : index
    %c0_13 = arith.constant 0 : index
    %20 = vector.load %arg5[%c0_11, %c0_12, %c0_13] : memref<1x3x128xf32, #tpu.memory_space<vmem>>, vector<1x1x128xf32>
    %21 = vector.shape_cast %20 : vector<1x1x128xf32> to vector<1x128xf32>
    %22 = vector.broadcast %21 : vector<1x128xf32> to vector<64x128xf32>
    %23 = arith.addf %19, %22 : vector<64x128xf32>
    %24 = vector.extract_strided_slice %23 {offsets = [0, 0], sizes = [64, 32], strides = [1, 1]} : vector<64x128xf32> to vector<64x32xf32>
    %25 = vector.extract_strided_slice %23 {offsets = [0, 32], sizes = [64, 32], strides = [1, 1]} : vector<64x128xf32> to vector<64x32xf32>
    %26 = vector.extract_strided_slice %23 {offsets = [0, 64], sizes = [64, 32], strides = [1, 1]} : vector<64x128xf32> to vector<64x32xf32>
    %27 = vector.extract_strided_slice %23 {offsets = [0, 96], sizes = [64, 32], strides = [1, 1]} : vector<64x128xf32> to vector<64x32xf32>
    %28 = arith.mulf %25, %26 : vector<64x32xf32>
    %cst_14 = arith.constant dense<0xFF800000> : vector<64xf32>
    %29 = vector.multi_reduction <maximumf>, %28, %cst_14 [1] : vector<64x32xf32> to vector<64xf32>
    %30 = vector.shape_cast %29 : vector<64xf32> to vector<64x1xf32>
    %31 = vector.broadcast %30 : vector<64x1xf32> to vector<64x32xf32>
    %32 = arith.subf %28, %31 : vector<64x32xf32>
    %33 = math.exp %32 : vector<64x32xf32>
    %cst_15 = arith.constant dense<0.000000e+00> : vector<64xf32>
    %34 = vector.multi_reduction <add>, %33, %cst_15 [1] : vector<64x32xf32> to vector<64xf32>
    %35 = vector.shape_cast %34 : vector<64xf32> to vector<64x1xf32>
    %36 = tpu.reciprocal %35 {approx = true} : vector<64x1xf32> -> vector<64x1xf32>
    %37 = vector.broadcast %36 : vector<64x1xf32> to vector<64x32xf32>
    %38 = arith.mulf %33, %37 : vector<64x32xf32>
    %39 = arith.mulf %27, %38 : vector<64x32xf32>
    %40 = arith.addf %39, %24 : vector<64x32xf32>
    %41 = arith.truncf %40 : vector<64x32xf32> to vector<64x32xbf16>
    %c0_16 = arith.constant 0 : index
    %c1 = arith.constant 1 : index
    %c0_17 = arith.constant 0 : index
    %c0_18 = arith.constant 0 : index
    %42 = vector.load %arg4[%c0_16, %c1, %c0_17, %c0_18] : memref<1x3x128x128xbf16, #tpu.memory_space<vmem>>, vector<1x1x128x128xbf16>
    %43 = vector.shape_cast %42 : vector<1x1x128x128xbf16> to vector<128x128xbf16>
    %44 = vector.extract_strided_slice %43 {offsets = [0, 0], sizes = [32, 128], strides = [1, 1]} : vector<128x128xbf16> to vector<32x128xbf16>
    %cst_19 = arith.constant dense<0.000000e+00> : vector<64x128xf32>
    %45 = tpu.matmul %41, %44, %cst_19 {dimension_numbers = #tpu.dot_dimension_numbers<[1], [0], [0], [1], [0, 0, 1, 1], [], []>} : vector<64x32xbf16>, vector<32x128xbf16>, vector<64x128xf32> -> vector<64x128xf32>
    %c0_20 = arith.constant 0 : index
    %c1_21 = arith.constant 1 : index
    %c0_22 = arith.constant 0 : index
    %46 = vector.load %arg5[%c0_20, %c1_21, %c0_22] : memref<1x3x128xf32, #tpu.memory_space<vmem>>, vector<1x1x128xf32>
    %47 = vector.shape_cast %46 : vector<1x1x128xf32> to vector<1x128xf32>
    %48 = vector.broadcast %47 : vector<1x128xf32> to vector<64x128xf32>
    %49 = arith.addf %45, %48 : vector<64x128xf32>
    %cst_23 = arith.constant 0.000000e+00 : f32
    %50 = vector.broadcast %cst_23 : f32 to vector<64x128xf32>
    %51 = arith.maximumf %49, %50 : vector<64x128xf32>
    %52 = arith.truncf %51 : vector<64x128xf32> to vector<64x128xbf16>
    %c0_24 = arith.constant 0 : index
    %c2 = arith.constant 2 : index
    %c0_25 = arith.constant 0 : index
    %c0_26 = arith.constant 0 : index
    %53 = vector.load %arg4[%c0_24, %c2, %c0_25, %c0_26] : memref<1x3x128x128xbf16, #tpu.memory_space<vmem>>, vector<1x1x128x128xbf16>
    %54 = vector.shape_cast %53 : vector<1x1x128x128xbf16> to vector<128x128xbf16>
    %cst_27 = arith.constant dense<0.000000e+00> : vector<64x128xf32>
    %55 = tpu.matmul %52, %54, %cst_27 {dimension_numbers = #tpu.dot_dimension_numbers<[1], [0], [0], [1], [0, 0, 1, 1], [], []>} : vector<64x128xbf16>, vector<128x128xbf16>, vector<64x128xf32> -> vector<64x128xf32>
    %c0_28 = arith.constant 0 : index
    %c2_29 = arith.constant 2 : index
    %c0_30 = arith.constant 0 : index
    %56 = vector.load %arg5[%c0_28, %c2_29, %c0_30] : memref<1x3x128xf32, #tpu.memory_space<vmem>>, vector<1x1x128xf32>
    %57 = vector.shape_cast %56 : vector<1x1x128xf32> to vector<1x128xf32>
    %58 = vector.broadcast %57 : vector<1x128xf32> to vector<64x128xf32>
    %59 = arith.addf %55, %58 : vector<64x128xf32>
    %60 = arith.truncf %59 : vector<64x128xf32> to vector<64x128xbf16>
    %c0_31 = arith.constant 0 : index
    %c0_32 = arith.constant 0 : index
    %c0_33 = arith.constant 0 : index
    %61 = vector.load %arg6[%c0_31, %c0_32, %c0_33] : memref<1x64x128xbf16, #tpu.memory_space<vmem>>, vector<1x64x128xbf16>
    %62 = vector.shape_cast %61 : vector<1x64x128xbf16> to vector<64x128xbf16>
    %63 = vector.shape_cast %60 : vector<64x128xbf16> to vector<1x64x128xbf16>
    tpu.vector_store %arg6[%c0_31, %c0_32, %c0_33], %63 {strides = array<i32>} : memref<1x64x128xbf16, #tpu.memory_space<vmem>>, vector<1x64x128xbf16>,
    return
  }
  func.func @transform_0(%arg0: i32, %arg1: i32) -> (i32, i32, i32) {
    %c0_i32 = arith.constant 0 : i32
    %c0_i32_0 = arith.constant 0 : i32
    return %arg0, %arg1, %c0_i32 : i32, i32, i32
  }
  func.func @transform_1(%arg0: i32, %arg1: i32) -> (i32, i32) {
    %c0_i32 = arith.constant 0 : i32
    %c0_i32_0 = arith.constant 0 : i32
    %c0_i32_1 = arith.constant 0 : i32
    return %c0_i32, %c0_i32_0 : i32, i32
  }
  func.func @transform_2(%arg0: i32, %arg1: i32) -> (i32, i32, i32, i32) {
    %c0_i32 = arith.constant 0 : i32
    %c0_i32_0 = arith.constant 0 : i32
    %c0_i32_1 = arith.constant 0 : i32
    %c0_i32_2 = arith.constant 0 : i32
    return %arg0, %c0_i32, %c0_i32_0, %c0_i32_1 : i32, i32, i32, i32
  }
  func.func @transform_3(%arg0: i32, %arg1: i32) -> (i32, i32, i32) {
    %c0_i32 = arith.constant 0 : i32
    %c0_i32_0 = arith.constant 0 : i32
    %c0_i32_1 = arith.constant 0 : i32
    return %arg0, %c0_i32, %c0_i32_0 : i32, i32, i32
  }
  func.func @transform_4(%arg0: i32, %arg1: i32) -> (i32, i32, i32) {
    %c0_i32 = arith.constant 0 : i32
    %c0_i32_0 = arith.constant 0 : i32
    return %arg0, %arg1, %c0_i32 : i32, i32, i32
  }
}

</mosaic_0001>

<llo_original>
// kernel: tpu_custom_call.1
$region0: #{tpu_custom_call.1}
  #allocation0 [shape = 'u32[]', space=smem, size = 0x4, offset = 0x4, fixed_abs, tag = 'smem constant byte address 0x4 - core index']
  #allocation1 [shape = 'u32[144,128]{1,0:T(1,128)}', space=vmem, size = 0x12000, scoped, tag = 'internal scratch']
  %s0 = inlined_call_operand.vmem [shape: s32[2,64,2], index: 0, kind: input, shape index: {}]
  %s1 = inlined_call_operand.vmem [shape: bf16[128,128], index: 1, kind: input, shape index: {}]
  %s2 = inlined_call_operand.hbm [shape: bf16[2,3,128,128], index: 2, kind: input, shape index: {}]
  %s3 = inlined_call_operand.vmem [shape: f32[2,3,128], index: 3, kind: input, shape index: {}]
  %s4 = inlined_call_operand.hbm [shape: bf16[2,64,128], index: 4, kind: output, shape index: {}]
  %s5 = sld [smem:[#allocation0]]
  $region53: #{tpu_custom_call.1} parent=0
    _
  %s7 = ssub.s32 1, %s5
  %s8 = scalar_select 0, %s7, %s5
  $region1: #{tpu_custom_call.1} parent=0
    #allocation2 [shape = 'u8[196608]{0}', space=vmem, size = 0x30000, scoped, tag = 'input window, operand 2']
    #allocation3 [shape = 's32[2]{0}', space=sflag, size = 0x8, scoped, tag = 'scoped memory for tpu_custom_call.1']
    #allocation4 [shape = 's32[2]{0}', space=sflag, size = 0x8, scoped, tag = 'scoped memory for tpu_custom_call.1']
    #allocation5 [shape = 'u8[32768]{0}', space=vmem, size = 0x8000, scoped, tag = 'output window, operand 0']
    %9 = vsyncpa [#allocation3], 0
    %s10 = scalar_lea.sflag [#allocation3], 1
    %11 = vsyncpa %s10, 0
    %12 = vsyncpa [#allocation4], 0
    %s13 = scalar_lea.sflag [#allocation4], 1
    %14 = vsyncpa %s13, 0
    loop: start=0, step=1, limit=4
    $region2: #{tpu_custom_call.1} parent=1 // loop_pre_header
      _
    $region3: #{tpu_custom_call.1} parent=1 // loop_header
      %s16 = sphi 0, %s20
      %p17 = scmp.ge.s32.totalorder %s16, 4
      %s23 = sphi 0, %s35
      %s24 = sphi 0, %s31
      %s25 = sphi 0, %s23
      %s26 = sphi 0, %s24
      %s27 = sphi 0, %s25
      %s28 = sphi 0, %s26
      %s40 = sphi 0, %s42
      %s43 = sphi 0, %s40
      %s44 = sphi 0, %s43
      %s60 = sphi 0, %s44
      %s64 = sphi 0, %s64
      %s66 = sphi 0, %s64
      %s67 = sphi 0, %s66
      %s81 = sphi 0, %s67
      %s87 = sphi 0, %s89
      %s90 = sphi 0, %s87
      %s91 = sphi 0, %s90
      %s107 = sphi 0, %s91
      %s113 = sphi 0, %s115
      %s116 = sphi 0, %s113
      %s117 = sphi 0, %s116
      %s133 = sphi 0, %s117
      %s141 = sphi 0, %s143
      %s144 = sphi 0, %s141
      %s145 = sphi 0, %s144
      %s161 = sphi 0, %s145
    $region4: #{tpu_custom_call.1} parent=1 // loop_header_branch
      %19 = sbr.rel (%p17) target = $region8
    $region5: #{tpu_custom_call.1} parent=1 // loop_body
      %s21 = ssub.s32 %s16, 1
      %s22 = ssub.s32 %s16, 2
      %s29 = sadd.s32 1, %s24
      %p30 = scmp.ge.s32.totalorder %s29, 1
      %s31 = scalar_select %p30, 0, %s29
      %s32 = sadd.s32 1, %s23
      %s33 = scalar_select %p30, %s32, %s23
      %p34 = scmp.ge.s32.totalorder %s33, 2
      %s35 = scalar_select %p34, 0, %s33
      %s36 = ssub.s32 %s23, %s35
      %s37 = ssub.s32 %s24, %s31
      %s38 = sor.u32 %s36, %s37
      %p39 = scmp.eq.s32.totalorder %s38, 0
      %s41 = sadd.s32 %s40, 1
      %s42 = scalar_select %p39, %s40, %s41
      %p45 = pneg %p39
      %p46 = scmp.eq.s32.totalorder %s16, 1
      %p47 = por %p45, %p46
      %p48 = scmp.ne.s32.totalorder %s40, %s43
      %p49 = scmp.eq.s32.totalorder %s16, 0
      %p50 = por %p48, %p49
      %p51 = scmp.ne.s32.totalorder %s40, %s43
      %p52 = scmp.eq.s32.totalorder %s21, 1
      %p53 = por %p51, %p52
      %p54 = scmp.ne.s32.totalorder %s43, %s44
      %p55 = scmp.eq.s32.totalorder %s21, 0
      %p56 = por %p54, %p55
      %p57 = scmp.ne.s32.totalorder %s43, %s44
      %p58 = scmp.eq.s32.totalorder %s22, 1
      %p59 = por %p57, %p58
      %p61 = scmp.ne.s32.totalorder %s44, %s60
      %p62 = scmp.eq.s32.totalorder %s22, 0
      %p63 = por %p61, %p62
      %s65 = sadd.s32 %s64, 1
      %p68 = scmp.eq.s32.totalorder %s16, 1
      %p69 = scmp.ne.s32.totalorder %s64, %s66
      %p70 = scmp.eq.s32.totalorder %s16, 0
      %p71 = por %p69, %p70
      %p72 = scmp.ne.s32.totalorder %s64, %s66
      %p73 = scmp.eq.s32.totalorder %s21, 1
      %p74 = por %p72, %p73
      %p75 = scmp.ne.s32.totalorder %s66, %s67
      %p76 = scmp.eq.s32.totalorder %s21, 0
      %p77 = por %p75, %p76
      %p78 = scmp.ne.s32.totalorder %s66, %s67
      %p79 = scmp.eq.s32.totalorder %s22, 1
      %p80 = por %p78, %p79
      %p82 = scmp.ne.s32.totalorder %s67, %s81
      %p83 = scmp.eq.s32.totalorder %s22, 0
      %p84 = por %p82, %p83
      %s85 = ssub.s32 %s23, %s35
      %p86 = scmp.eq.s32.totalorder %s85, 0
      %s88 = sadd.s32 %s87, 1
      %s89 = scalar_select %p86, %s87, %s88
      %p92 = pneg %p86
      %p93 = scmp.eq.s32.totalorder %s16, 1
      %p94 = por %p92, %p93
      %p95 = scmp.ne.s32.totalorder %s87, %s90
      %p96 = scmp.eq.s32.totalorder %s16, 0
      %p97 = por %p95, %p96
      %p98 = scmp.ne.s32.totalorder %s87, %s90
      %p99 = scmp.eq.s32.totalorder %s21, 1
      %p100 = por %p98, %p99
      %p101 = scmp.ne.s32.totalorder %s90, %s91
      %p102 = scmp.eq.s32.totalorder %s21, 0
      %p103 = por %p101, %p102
      %p104 = scmp.ne.s32.totalorder %s90, %s91
      %p105 = scmp.eq.s32.totalorder %s22, 1
      %p106 = por %p104, %p105
      %p108 = scmp.ne.s32.totalorder %s91, %s107
      %p109 = scmp.eq.s32.totalorder %s22, 0
      %p110 = por %p108, %p109
      %s111 = ssub.s32 %s23, %s35
      %p112 = scmp.eq.s32.totalorder %s111, 0
      %s114 = sadd.s32 %s113, 1
      %s115 = scalar_select %p112, %s113, %s114
      %p118 = pneg %p112
      %p119 = scmp.eq.s32.totalorder %s16, 1
      %p120 = por %p118, %p119
      %p121 = scmp.ne.s32.totalorder %s113, %s116
      %p122 = scmp.eq.s32.totalorder %s16, 0
      %p123 = por %p121, %p122
      %p124 = scmp.ne.s32.totalorder %s113, %s116
      %p125 = scmp.eq.s32.totalorder %s21, 1
      %p126 = por %p124, %p125
      %p127 = scmp.ne.s32.totalorder %s116, %s117
      %p128 = scmp.eq.s32.totalorder %s21, 0
      %p129 = por %p127, %p128
      %p130 = scmp.ne.s32.totalorder %s116, %s117
      %p131 = scmp.eq.s32.totalorder %s22, 1
      %p132 = por %p130, %p131
      %p134 = scmp.ne.s32.totalorder %s117, %s133
      %p135 = scmp.eq.s32.totalorder %s22, 0
      %p136 = por %p134, %p135
      %s137 = ssub.s32 %s23, %s35
      %s138 = ssub.s32 %s24, %s31
      %s139 = sor.u32 %s137, %s138
      %p140 = scmp.eq.s32.totalorder %s139, 0
      %s142 = sadd.s32 %s141, 1
      %s143 = scalar_select %p140, %s141, %s142
      %p146 = pneg %p140
      %p147 = scmp.eq.s32.totalorder %s16, 1
      %p148 = por %p146, %p147
      %p149 = scmp.ne.s32.totalorder %s141, %s144
      %p150 = scmp.eq.s32.totalorder %s16, 0
      %p151 = por %p149, %p150
      %p152 = scmp.ne.s32.totalorder %s141, %s144
      %p153 = scmp.eq.s32.totalorder %s21, 1
      %p154 = por %p152, %p153
      %p155 = scmp.ne.s32.totalorder %s144, %s145
      %p156 = scmp.eq.s32.totalorder %s21, 0
      %p157 = por %p155, %p156
      %p158 = scmp.ne.s32.totalorder %s144, %s145
      %p159 = scmp.eq.s32.totalorder %s22, 1
      %p160 = por %p158, %p159
      %p162 = scmp.ne.s32.totalorder %s145, %s161
      %p163 = scmp.eq.s32.totalorder %s22, 0
      %p164 = por %p162, %p163
      %p165 = scmp.le.s32.totalorder 1, %s16
      %p166 = scmp.lt.s32.totalorder %s16, 3
      %p167 = pnand %p165, %p166
      %p168 = pneg %p167
      // Predicated region
      $region9: #{tpu_custom_call.1} parent=5 // pred_check
        _
      $region10: #{tpu_custom_call.1} parent=5 // pred_check_branch
        %170 = sbr.rel (%p167) target = $region12
      $region11: #{tpu_custom_call.1} parent=5 // pred_region
        %s171 = ssub.s32 %s16, 1
        // Predicated region
        $region13: #{tpu_custom_call.1} parent=11 // pred_check
          %p172 = pneg %p77
        $region14: #{tpu_custom_call.1} parent=11 // pred_check_branch
          %174 = sbr.rel (%p172) target = $region16
        $region15: #{tpu_custom_call.1} parent=11 // pred_region
          _
        $region16: #{tpu_custom_call.1} parent=11 // pred_fallthru
          _
      $region12: #{tpu_custom_call.1} parent=5 // pred_fallthru
        _
      %p175 = scmp.lt.s32.totalorder %s16, 2
      // Predicated region
      $region17: #{tpu_custom_call.1} parent=5 // pred_check
        %p176 = pneg %p175
      $region18: #{tpu_custom_call.1} parent=5 // pred_check_branch
        %178 = sbr.rel (%p176) target = $region20
      $region19: #{tpu_custom_call.1} parent=5 // pred_region
        // Predicated region
        $region21: #{tpu_custom_call.1} parent=19 // pred_check
          %p179 = pneg %p50
        $region22: #{tpu_custom_call.1} parent=19 // pred_check_branch
          %181 = sbr.rel (%p179) target = $region24
        $region23: #{tpu_custom_call.1} parent=19 // pred_region
          %s182 = smul.u32 8, %s24
          %p183 = scmp.lt.s32.totalorder %s23, 1
          %s184 = scalar_select %p183, %s23, 1
          %p185 = scmp.lt.s32.totalorder %s182, 7
          %s186 = scalar_select %p185, %s182, 7
          %s187 = smul.addr %s184, 8
          %s188 = sadd.s32 %s186, %s187
          %s189 = smul.addr %s188, 8
          %s190 = scalar_lea.vmem %s0, %s189
          %s191 = smul.u32 8, %s24
        $region24: #{tpu_custom_call.1} parent=19 // pred_fallthru
          _
        // Predicated region
        $region25: #{tpu_custom_call.1} parent=19 // pred_check
          %p192 = pneg %p97
        $region26: #{tpu_custom_call.1} parent=19 // pred_check_branch
          %194 = sbr.rel (%p192) target = $region28
        $region27: #{tpu_custom_call.1} parent=19 // pred_region
          %s195 = sand.u32 %s87, 1
          %s196 = scalar_lea.sflag [#allocation3], %s195
          %s197 = sand.u32 %s87, 1
          %s198 = smul.addr %s197, 192
          %s199 = scalar_lea.vmem [#allocation2], %s198
          %s201 = ssub.s32 3072, 3072
          %202 = vsyncadd %s196, %s201
          %s203 = smul.addr %s23, 48
          %s204 = smul.addr %s203, 64
          %s205 = scalar_lea.hbm %s2, %s204
          %s206 = sshll.u32 %s199, 4
          %s207 = int_to_ptr.vmem [resolvable:$true] %s206
          %212 = dma.hbm_to_vmem [thread:$0]  %s205, 3072, %s207, %s196, 64, 64, 4
        $region28: #{tpu_custom_call.1} parent=19 // pred_fallthru
          _
        // Predicated region
        $region29: #{tpu_custom_call.1} parent=19 // pred_check
          %p213 = pneg %p123
        $region30: #{tpu_custom_call.1} parent=19 // pred_check_branch
          %215 = sbr.rel (%p213) target = $region32
        $region31: #{tpu_custom_call.1} parent=19 // pred_region
          %p216 = scmp.lt.s32.totalorder %s23, 1
          %s217 = scalar_select %p216, %s23, 1
          %s218 = smul.addr %s217, 4
          %s219 = scalar_lea.vmem %s3, %s218
        $region32: #{tpu_custom_call.1} parent=19 // pred_fallthru
          _
      $region20: #{tpu_custom_call.1} parent=5 // pred_fallthru
        _
      %p220 = scmp.le.s32.totalorder 1, %s16
      %p221 = scmp.lt.s32.totalorder %s16, 3
      %p222 = pnand %p220, %p221
      %p223 = pneg %p222
      // Predicated region
      $region33: #{tpu_custom_call.1} parent=5 // pred_check
        _
      $region34: #{tpu_custom_call.1} parent=5 // pred_check_branch
        %225 = sbr.rel (%p222) target = $region36
      $region35: #{tpu_custom_call.1} parent=5 // pred_region
        %s226 = ssub.s32 %s16, 1
        %s227 = sand.u32 %s90, 1
        %s228 = scalar_lea.sflag [#allocation3], %s227
        %s229 = sand.u32 %s90, 1
        %s230 = smul.addr %s229, 192
        %s231 = scalar_lea.vmem [#allocation2], %s230
        // Predicated region
        $region37: #{tpu_custom_call.1} parent=35 // pred_check
          %p232 = pneg %p103
        $region38: #{tpu_custom_call.1} parent=35 // pred_check_branch
          %234 = sbr.rel (%p232) target = $region40
        $region39: #{tpu_custom_call.1} parent=35 // pred_region
          %235 = dma.done %s228, 3072
        $region40: #{tpu_custom_call.1} parent=35 // pred_fallthru
          _
        %s236 = smul.u32 8, %s26
        %p237 = scmp.lt.s32.totalorder %s25, 1
        %s238 = scalar_select %p237, %s25, 1
        %p239 = scmp.lt.s32.totalorder %s236, 7
        %s240 = scalar_select %p239, %s236, 7
        %s241 = smul.addr %s238, 8
        %s242 = sadd.s32 %s240, %s241
        %s243 = smul.addr %s242, 8
        %s244 = scalar_lea.vmem %s0, %s243
        %p245 = pneg %p56
        %p246 = pneg %p53
        %p247 = pneg %p77
        %p248 = pneg %p74
        %s249 = sand.u32 %s90, 1
        %s250 = scalar_lea.sflag [#allocation3], %s249
        %s251 = sand.u32 %s90, 1
        %s252 = smul.addr %s251, 192
        %s253 = scalar_lea.vmem [#allocation2], %s252
        %p254 = pneg %p103
        %p255 = pneg %p100
        %p256 = scmp.lt.s32.totalorder %s25, 1
        %s257 = scalar_select %p256, %s25, 1
        %s258 = smul.addr %s257, 4
        %s259 = scalar_lea.vmem %s3, %s258
        %p260 = pneg %p129
        %p261 = pneg %p126
        %p262 = pneg %p157
        %p263 = pneg %p154
        %s264 = sand.u32 %s144, 1
        %s265 = scalar_lea.sflag [#allocation4], %s264
        %s266 = sand.u32 %s144, 1
        %s267 = smul.addr %s266, 32
        %s268 = scalar_lea.vmem [#allocation5], %s267
        %s269 = smul.u32 8, %s26
        %p270 = scmp.lt.s32.totalorder %s25, 1
        %s271 = scalar_select %p270, %s25, 1
        %p272 = scmp.lt.s32.totalorder %s269, 7
        %s273 = scalar_select %p272, %s269, 7
        %s274 = smul.addr %s271, 8
        %s275 = sadd.s32 %s273, %s274
        %s276 = smul.addr %s275, 8
        %s277 = scalar_lea.vmem %s0, %s276
        %s278 = smul.u32 8, %s26
        %p279 = scmp.lt.s32.totalorder %s25, 1
        %s280 = scalar_select %p279, %s25, 1
        %s281 = smul.addr %s280, 4
        %s282 = scalar_lea.vmem %s3, %s281
        %s283 = smul.u32 8, %s26
        %v285 = vld [vmem:[%s277] sm:$0xff]
        %v286 = vld [vmem:[%s277 + $0x8] sm:$0xff]
        %v287 = vld [vmem:[%s277 + $0x10] sm:$0xff]
        %v288 = vld [vmem:[%s277 + $0x18] sm:$0xff]
        %v289 = vld [vmem:[%s277 + $0x20] sm:$0xff]
        %v290 = vld [vmem:[%s277 + $0x28] sm:$0xff]
        %v291 = vld [vmem:[%s277 + $0x30] sm:$0xff]
        %v292 = vld [vmem:[%s277 + $0x38] sm:$0xff]
        %v293 = vlaneseq
        %v294 = vand.u32 %v293, 127
        %295 = vset.pattern.permute.xlu0 0
        %296 = vperm.xlu0 %295, %v285
        %v297 = vpop.permute.xlu0 %296
        %298 = vset.pattern.permute.xlu0 0
        %299 = vperm.xlu0 %298, %v286
        %v300 = vpop.permute.xlu0 %299
        %301 = vset.pattern.permute.xlu0 0
        %302 = vperm.xlu0 %301, %v287
        %v303 = vpop.permute.xlu0 %302
        %304 = vset.pattern.permute.xlu0 0
        %305 = vperm.xlu0 %304, %v288
        %v306 = vpop.permute.xlu0 %305
        %307 = vset.pattern.permute.xlu0 0
        %308 = vperm.xlu0 %307, %v289
        %v309 = vpop.permute.xlu0 %308
        %310 = vset.pattern.permute.xlu0 0
        %311 = vperm.xlu0 %310, %v290
        %v312 = vpop.permute.xlu0 %311
        %313 = vset.pattern.permute.xlu0 0
        %314 = vperm.xlu0 %313, %v291
        %v315 = vpop.permute.xlu0 %314
        %316 = vset.pattern.permute.xlu0 0
        %317 = vperm.xlu0 %316, %v292
        %v318 = vpop.permute.xlu0 %317
        %vm319 = vcmp.eq.s32.totalorder %v294, %v297
        %vm320 = vcmp.eq.s32.totalorder %v294, %v300
        %vm321 = vcmp.eq.s32.totalorder %v294, %v303
        %vm322 = vcmp.eq.s32.totalorder %v294, %v306
        %vm323 = vcmp.eq.s32.totalorder %v294, %v309
        %vm324 = vcmp.eq.s32.totalorder %v294, %v312
        %vm325 = vcmp.eq.s32.totalorder %v294, %v315
        %vm326 = vcmp.eq.s32.totalorder %v294, %v318
        %327 = vset.pattern.permute.xlu0 1
        %328 = vperm.xlu0 %327, %v285
        %v329 = vpop.permute.xlu0 %328
        %330 = vset.pattern.permute.xlu0 1
        %331 = vperm.xlu0 %330, %v286
        %v332 = vpop.permute.xlu0 %331
        %333 = vset.pattern.permute.xlu0 1
        %334 = vperm.xlu0 %333, %v287
        %v335 = vpop.permute.xlu0 %334
        %336 = vset.pattern.permute.xlu0 1
        %337 = vperm.xlu0 %336, %v288
        %v338 = vpop.permute.xlu0 %337
        %339 = vset.pattern.permute.xlu0 1
        %340 = vperm.xlu0 %339, %v289
        %v341 = vpop.permute.xlu0 %340
        %342 = vset.pattern.permute.xlu0 1
        %343 = vperm.xlu0 %342, %v290
        %v344 = vpop.permute.xlu0 %343
        %345 = vset.pattern.permute.xlu0 1
        %346 = vperm.xlu0 %345, %v291
        %v347 = vpop.permute.xlu0 %346
        %348 = vset.pattern.permute.xlu0 1
        %349 = vperm.xlu0 %348, %v292
        %v350 = vpop.permute.xlu0 %349
        %vm351 = vcmp.eq.s32.totalorder %v294, %v329
        %vm352 = vcmp.eq.s32.totalorder %v294, %v332
        %vm353 = vcmp.eq.s32.totalorder %v294, %v335
        %vm354 = vcmp.eq.s32.totalorder %v294, %v338
        %vm355 = vcmp.eq.s32.totalorder %v294, %v341
        %vm356 = vcmp.eq.s32.totalorder %v294, %v344
        %vm357 = vcmp.eq.s32.totalorder %v294, %v347
        %vm358 = vcmp.eq.s32.totalorder %v294, %v350
        %vm359 = vmor %vm319, %vm351
        %vm360 = vmor %vm320, %vm352
        %vm361 = vmor %vm321, %vm353
        %vm362 = vmor %vm322, %vm354
        %vm363 = vmor %vm323, %vm355
        %vm364 = vmor %vm324, %vm356
        %vm365 = vmor %vm325, %vm357
        %vm366 = vmor %vm326, %vm358
        %v367 = vsel %vm359, 1.0, 0.0
        %v368 = vsel %vm360, 1.0, 0.0
        %v369 = vsel %vm361, 1.0, 0.0
        %v370 = vsel %vm362, 1.0, 0.0
        %v371 = vsel %vm363, 1.0, 0.0
        %v372 = vsel %vm364, 1.0, 0.0
        %v373 = vsel %vm365, 1.0, 0.0
        %v374 = vsel %vm366, 1.0, 0.0
        %v375 = vpack.c.bf16 %v368, %v367
        %v376 = vpack.c.bf16 %v370, %v369
        %v377 = vpack.c.bf16 %v372, %v371
        %v378 = vpack.c.bf16 %v374, %v373
        %v379 = vld [vmem:[%s1] sm:$0xf]
        %v380 = vld [vmem:[%s1 + $0x4] sm:$0xf]
        %v381 = vld [vmem:[%s1 + $0x8] sm:$0xf]
        %v382 = vld [vmem:[%s1 + $0xc] sm:$0xf]
        %v383 = vld [vmem:[%s1 + $0x10] sm:$0xf]
        %v384 = vld [vmem:[%s1 + $0x14] sm:$0xf]
        %v385 = vld [vmem:[%s1 + $0x18] sm:$0xf]
        %v386 = vld [vmem:[%s1 + $0x1c] sm:$0xf]
        %v387 = vld [vmem:[%s1 + $0x20] sm:$0xf]
        %v388 = vld [vmem:[%s1 + $0x24] sm:$0xf]
        %v389 = vld [vmem:[%s1 + $0x28] sm:$0xf]
        %v390 = vld [vmem:[%s1 + $0x2c] sm:$0xf]
        %v391 = vld [vmem:[%s1 + $0x30] sm:$0xf]
        %v392 = vld [vmem:[%s1 + $0x34] sm:$0xf]
        %v393 = vld [vmem:[%s1 + $0x38] sm:$0xf]
        %v394 = vld [vmem:[%s1 + $0x3c] sm:$0xf]
        %v411 = vunpack.c.l.b16 %v379
        %v412 = vunpack.c.l.b16 %v380
        %v413 = vunpack.c.l.b16 %v381
        %v414 = vunpack.c.l.b16 %v382
        %v415 = vunpack.c.l.b16 %v383
        %v416 = vunpack.c.l.b16 %v384
        %v417 = vunpack.c.l.b16 %v385
        %v418 = vunpack.c.l.b16 %v386
        %v419 = vunpack.c.l.b16 %v387
        %v420 = vunpack.c.l.b16 %v388
        %v421 = vunpack.c.l.b16 %v389
        %v422 = vunpack.c.l.b16 %v390
        %v423 = vunpack.c.l.b16 %v391
        %v424 = vunpack.c.l.b16 %v392
        %v425 = vunpack.c.l.b16 %v393
        %v426 = vunpack.c.l.b16 %v394
        %v427 = vpack.c.b16 %v412, %v411
        %v428 = vpack.c.b16 %v414, %v413
        %v429 = vpack.c.b16 %v416, %v415
        %v430 = vpack.c.b16 %v418, %v417
        %v431 = vpack.c.b16 %v420, %v419
        %v432 = vpack.c.b16 %v422, %v421
        %v433 = vpack.c.b16 %v424, %v423
        %v434 = vpack.c.b16 %v426, %v425
        %443 = vmatprep.subr.bf16.mxu0 0
        %444 = vmatpush1.bf16.msra.mxu0 %v434
        %445 = vmatprep.subr.bf16.mxu0 0
        %446 = vmatpush1.bf16.msra.mxu0 %v433
        %447 = vmatprep.subr.bf16.mxu0 0
        %448 = vmatpush1.bf16.msra.mxu0 %v432
        %449 = vmatprep.subr.bf16.mxu0 0
        %450 = vmatpush1.bf16.msra.mxu0 %v431
        %451 = vmatprep.subr.bf16.mxu0 0
        %452 = vmatpush1.bf16.msra.mxu0 %v430
        %453 = vmatprep.subr.bf16.mxu0 0
        %454 = vmatpush1.bf16.msra.mxu0 %v429
        %455 = vmatprep.subr.bf16.mxu0 0
        %456 = vmatpush1.bf16.msra.mxu0 %v428
        %457 = vmatprep.subr.bf16.mxu0 0
        %458 = vmatpush1.bf16.msra.mxu0 %v427
        %459 = vmatprep.subr.bf16.mxu0 0
        %460 = vmatpush2.bf16.msra.mxu0 0
        %461 = vmatprep.subr.bf16.mxu0 0
        %462 = vmatpush2.bf16.msra.mxu0 0
        %463 = vmatprep.subr.bf16.mxu0 0
        %464 = vmatpush2.bf16.msra.mxu0 0
        %465 = vmatprep.subr.bf16.mxu0 0
        %466 = vmatpush2.bf16.msra.mxu0 0
        %467 = vmatprep.subr.bf16.mxu0 0
        %468 = vmatpush2.bf16.msra.mxu0 0
        %469 = vmatprep.subr.bf16.mxu0 0
        %470 = vmatpush2.bf16.msra.mxu0 0
        %471 = vmatprep.subr.bf16.mxu0 0
        %472 = vmatpush2.bf16.msra.mxu0 0
        %473 = vmatprep.subr.bf16.mxu0 0
        %474 = vmatpush2.bf16.msra.mxu0 0
        %475 = vmatprep.mubr.bf16.mxu0 0
        %476 = vmatmul.mubr.bf16.gmra.mxu0 %v375
        %v477 = vpop.f32.mrf.mxu0
        %v478 = vadd.f32 0.0, %v477
        %v479 = vpop.f32.mrf.mxu0
        %v480 = vpop.f32.mrf.mxu0
        %v481 = vadd.f32 0.0, %v480
        %v482 = vpop.f32.mrf.mxu0
        %483 = vmatprep.mubr.bf16.mxu0 0
        %484 = vmatmul.mubr.bf16.gmra.mxu0 %v376
        %v485 = vpop.f32.mrf.mxu0
        %v486 = vadd.f32 0.0, %v485
        %v487 = vpop.f32.mrf.mxu0
        %v488 = vpop.f32.mrf.mxu0
        %v489 = vadd.f32 0.0, %v488
        %v490 = vpop.f32.mrf.mxu0
        %491 = vmatprep.mubr.bf16.mxu0 0
        %492 = vmatmul.mubr.bf16.gmra.mxu0 %v377
        %v493 = vpop.f32.mrf.mxu0
        %v494 = vadd.f32 0.0, %v493
        %v495 = vpop.f32.mrf.mxu0
        %v496 = vpop.f32.mrf.mxu0
        %v497 = vadd.f32 0.0, %v496
        %v498 = vpop.f32.mrf.mxu0
        %499 = vmatprep.mubr.bf16.mxu0 0
        %500 = vmatmul.mubr.bf16.gmra.mxu0 %v378
        %v501 = vpop.f32.mrf.mxu0
        %v502 = vadd.f32 0.0, %v501
        %v503 = vpop.f32.mrf.mxu0
        %v504 = vpop.f32.mrf.mxu0
        %v505 = vadd.f32 0.0, %v504
        %v506 = vpop.f32.mrf.mxu0
        %507 = vdwg.mxu0
        %v508 = vpack.c.bf16 %v481, %v478
        %v509 = vpack.c.bf16 %v489, %v486
        %v510 = vpack.c.bf16 %v497, %v494
        %v511 = vpack.c.bf16 %v505, %v502
        %v512 = vld [vmem:[%s231] sm:$0xf]
        %v513 = vld [vmem:[%s231 + $0x4] sm:$0xf]
        %v514 = vld [vmem:[%s231 + $0x8] sm:$0xf]
        %v515 = vld [vmem:[%s231 + $0xc] sm:$0xf]
        %v516 = vld [vmem:[%s231 + $0x10] sm:$0xf]
        %v517 = vld [vmem:[%s231 + $0x14] sm:$0xf]
        %v518 = vld [vmem:[%s231 + $0x18] sm:$0xf]
        %v519 = vld [vmem:[%s231 + $0x1c] sm:$0xf]
        %v520 = vld [vmem:[%s231 + $0x20] sm:$0xf]
        %v521 = vld [vmem:[%s231 + $0x24] sm:$0xf]
        %v522 = vld [vmem:[%s231 + $0x28] sm:$0xf]
        %v523 = vld [vmem:[%s231 + $0x2c] sm:$0xf]
        %v524 = vld [vmem:[%s231 + $0x30] sm:$0xf]
        %v525 = vld [vmem:[%s231 + $0x34] sm:$0xf]
        %v526 = vld [vmem:[%s231 + $0x38] sm:$0xf]
        %v527 = vld [vmem:[%s231 + $0x3c] sm:$0xf]
        %v528 = vld [vmem:[%s282] sm:$0x1]
        %v529 = vlaneseq
        %v530 = vshrl.u32 %v529, 7
        %v531 = vsub.s32 0, %v530
        %v532 = vrot.slane %v528, %v531
        %v549 = vunpack.c.l.b16 %v512
        %v550 = vunpack.c.l.b16 %v513
        %v551 = vunpack.c.l.b16 %v514
        %v552 = vunpack.c.l.b16 %v515
        %v553 = vunpack.c.l.b16 %v516
        %v554 = vunpack.c.l.b16 %v517
        %v555 = vunpack.c.l.b16 %v518
        %v556 = vunpack.c.l.b16 %v519
        %v557 = vunpack.c.l.b16 %v520
        %v558 = vunpack.c.l.b16 %v521
        %v559 = vunpack.c.l.b16 %v522
        %v560 = vunpack.c.l.b16 %v523
        %v561 = vunpack.c.l.b16 %v524
        %v562 = vunpack.c.l.b16 %v525
        %v563 = vunpack.c.l.b16 %v526
        %v564 = vunpack.c.l.b16 %v527
        %v565 = vpack.c.b16 %v550, %v549
        %v566 = vpack.c.b16 %v552, %v551
        %v567 = vpack.c.b16 %v554, %v553
        %v568 = vpack.c.b16 %v556, %v555
        %v569 = vpack.c.b16 %v558, %v557
        %v570 = vpack.c.b16 %v560, %v559
        %v571 = vpack.c.b16 %v562, %v561
        %v572 = vpack.c.b16 %v564, %v563
        %581 = vmatprep.subr.bf16.mxu0 0
        %582 = vmatpush1.bf16.msra.mxu0 %v572
        %583 = vmatprep.subr.bf16.mxu0 0
        %584 = vmatpush1.bf16.msra.mxu0 %v571
        %585 = vmatprep.subr.bf16.mxu0 0
        %586 = vmatpush1.bf16.msra.mxu0 %v570
        %587 = vmatprep.subr.bf16.mxu0 0
        %588 = vmatpush1.bf16.msra.mxu0 %v569
        %589 = vmatprep.subr.bf16.mxu0 0
        %590 = vmatpush1.bf16.msra.mxu0 %v568
        %591 = vmatprep.subr.bf16.mxu0 0
        %592 = vmatpush1.bf16.msra.mxu0 %v567
        %593 = vmatprep.subr.bf16.mxu0 0
        %594 = vmatpush1.bf16.msra.mxu0 %v566
        %595 = vmatprep.subr.bf16.mxu0 0
        %596 = vmatpush1.bf16.msra.mxu0 %v565
        %597 = vmatprep.subr.bf16.mxu0 0
        %598 = vmatpush2.bf16.msra.mxu0 0
        %599 = vmatprep.subr.bf16.mxu0 0
        %600 = vmatpush2.bf16.msra.mxu0 0
        %601 = vmatprep.subr.bf16.mxu0 0
        %602 = vmatpush2.bf16.msra.mxu0 0
        %603 = vmatprep.subr.bf16.mxu0 0
        %604 = vmatpush2.bf16.msra.mxu0 0
        %605 = vmatprep.subr.bf16.mxu0 0
        %606 = vmatpush2.bf16.msra.mxu0 0
        %607 = vmatprep.subr.bf16.mxu0 0
        %608 = vmatpush2.bf16.msra.mxu0 0
        %609 = vmatprep.subr.bf16.mxu0 0
        %610 = vmatpush2.bf16.msra.mxu0 0
        %611 = vmatprep.subr.bf16.mxu0 0
        %612 = vmatpush2.bf16.msra.mxu0 0
        %613 = vmatprep.mubr.bf16.mxu0 0
        %614 = vmatmul.mubr.bf16.gmra.mxu0 %v508
        %v615 = vpop.f32.mrf.mxu0
        %v616 = vadd.f32 %v532, %v615
        %v617 = vpop.f32.mrf.mxu0
        %v618 = vpop.f32.mrf.mxu0
        %v619 = vadd.f32 %v532, %v618
        %v620 = vpop.f32.mrf.mxu0
        %621 = vmatprep.mubr.bf16.mxu0 0
        %622 = vmatmul.mubr.bf16.gmra.mxu0 %v509
        %v623 = vpop.f32.mrf.mxu0
        %v624 = vadd.f32 %v532, %v623
        %v625 = vpop.f32.mrf.mxu0
        %v626 = vpop.f32.mrf.mxu0
        %v627 = vadd.f32 %v532, %v626
        %v628 = vpop.f32.mrf.mxu0
        %629 = vmatprep.mubr.bf16.mxu0 0
        %630 = vmatmul.mubr.bf16.gmra.mxu0 %v510
        %v631 = vpop.f32.mrf.mxu0
        %v632 = vadd.f32 %v532, %v631
        %v633 = vpop.f32.mrf.mxu0
        %v634 = vpop.f32.mrf.mxu0
        %v635 = vadd.f32 %v532, %v634
        %v636 = vpop.f32.mrf.mxu0
        %637 = vmatprep.mubr.bf16.mxu0 0
        %638 = vmatmul.mubr.bf16.gmra.mxu0 %v511
        %v639 = vpop.f32.mrf.mxu0
        %v640 = vadd.f32 %v532, %v639
        %v641 = vpop.f32.mrf.mxu0
        %v642 = vpop.f32.mrf.mxu0
        %v643 = vadd.f32 %v532, %v642
        %v644 = vpop.f32.mrf.mxu0
        %645 = vdwg.mxu0
        %654 = vrot.lane.b32.xlu0 %v616, 96
        %v655 = vpop.permute.xlu0 %654
        %656 = vrot.lane.b32.xlu0 %v619, 96
        %v657 = vpop.permute.xlu0 %656
        %658 = vrot.lane.b32.xlu0 %v624, 96
        %v659 = vpop.permute.xlu0 %658
        %660 = vrot.lane.b32.xlu0 %v627, 96
        %v661 = vpop.permute.xlu0 %660
        %662 = vrot.lane.b32.xlu0 %v632, 96
        %v663 = vpop.permute.xlu0 %662
        %664 = vrot.lane.b32.xlu0 %v635, 96
        %v665 = vpop.permute.xlu0 %664
        %666 = vrot.lane.b32.xlu0 %v640, 96
        %v667 = vpop.permute.xlu0 %666
        %668 = vrot.lane.b32.xlu0 %v643, 96
        %v669 = vpop.permute.xlu0 %668
        %v678 = vmul.f32 %v616, %v655
        %v679 = vmul.f32 %v619, %v657
        %v680 = vmul.f32 %v624, %v659
        %v681 = vmul.f32 %v627, %v661
        %v682 = vmul.f32 %v632, %v663
        %v683 = vmul.f32 %v635, %v665
        %v684 = vmul.f32 %v640, %v667
        %v685 = vmul.f32 %v643, %v669
        %vm686 = vcmask 523520
        %v687 = vsel %vm686, %v678, -inf
        %688 = vmax.xlane.f32.xlu0 %v687
        %v689 = vpop.xlane.xlu0 %688
        %v690 = vsel %vm686, %v679, -inf
        %691 = vmax.xlane.f32.xlu0 %v690
        %v692 = vpop.xlane.xlu0 %691
        %v693 = vsel %vm686, %v680, -inf
        %694 = vmax.xlane.f32.xlu0 %v693
        %v695 = vpop.xlane.xlu0 %694
        %v696 = vsel %vm686, %v681, -inf
        %697 = vmax.xlane.f32.xlu0 %v696
        %v698 = vpop.xlane.xlu0 %697
        %v699 = vsel %vm686, %v682, -inf
        %700 = vmax.xlane.f32.xlu0 %v699
        %v701 = vpop.xlane.xlu0 %700
        %v702 = vsel %vm686, %v683, -inf
        %703 = vmax.xlane.f32.xlu0 %v702
        %v704 = vpop.xlane.xlu0 %703
        %v705 = vsel %vm686, %v684, -inf
        %706 = vmax.xlane.f32.xlu0 %v705
        %v707 = vpop.xlane.xlu0 %706
        %v708 = vsel %vm686, %v685, -inf
        %709 = vmax.xlane.f32.xlu0 %v708
        %v710 = vpop.xlane.xlu0 %709
        %v711 = vsub.f32 %v678, %v689
        %v712 = vsub.f32 %v679, %v692
        %v713 = vsub.f32 %v680, %v695
        %v714 = vsub.f32 %v681, %v698
        %v715 = vsub.f32 %v682, %v701
        %v716 = vsub.f32 %v683, %v704
        %v717 = vsub.f32 %v684, %v707
        %v718 = vsub.f32 %v685, %v710
        %v719 = vmul.f32 %v711, 1.442695
        %v720 = vpow.pop %v719
        %v721 = vmul.f32 %v712, 1.442695
        %v722 = vpow.pop %v721
        %v723 = vmul.f32 %v713, 1.442695
        %v724 = vpow.pop %v723
        %v725 = vmul.f32 %v714, 1.442695
        %v726 = vpow.pop %v725
        %v727 = vmul.f32 %v715, 1.442695
        %v728 = vpow.pop %v727
        %v729 = vmul.f32 %v716, 1.442695
        %v730 = vpow.pop %v729
        %v731 = vmul.f32 %v717, 1.442695
        %v732 = vpow.pop %v731
        %v733 = vmul.f32 %v718, 1.442695
        %v734 = vpow.pop %v733
        %743 = vrot.lane.b32.xlu0 %v720, 96
        %v744 = vpop.permute.xlu0 %743
        %745 = vrot.lane.b32.xlu0 %v722, 96
        %v746 = vpop.permute.xlu0 %745
        %747 = vrot.lane.b32.xlu0 %v724, 96
        %v748 = vpop.permute.xlu0 %747
        %749 = vrot.lane.b32.xlu0 %v726, 96
        %v750 = vpop.permute.xlu0 %749
        %751 = vrot.lane.b32.xlu0 %v728, 96
        %v752 = vpop.permute.xlu0 %751
        %753 = vrot.lane.b32.xlu0 %v730, 96
        %v754 = vpop.permute.xlu0 %753
        %755 = vrot.lane.b32.xlu0 %v732, 96
        %v756 = vpop.permute.xlu0 %755
        %757 = vrot.lane.b32.xlu0 %v734, 96
        %v758 = vpop.permute.xlu0 %757
        %vm767 = vcmask 261120
        %v768 = vsel %vm767, %v744, 0.0
        %769 = vadd.xlane.f32.xlu0 %v768
        %v770 = vpop.xlane.xlu0 %769
        %v771 = vsel %vm767, %v746, 0.0
        %772 = vadd.xlane.f32.xlu0 %v771
        %v773 = vpop.xlane.xlu0 %772
        %v774 = vsel %vm767, %v748, 0.0
        %775 = vadd.xlane.f32.xlu0 %v774
        %v776 = vpop.xlane.xlu0 %775
        %v777 = vsel %vm767, %v750, 0.0
        %778 = vadd.xlane.f32.xlu0 %v777
        %v779 = vpop.xlane.xlu0 %778
        %v780 = vsel %vm767, %v752, 0.0
        %781 = vadd.xlane.f32.xlu0 %v780
        %v782 = vpop.xlane.xlu0 %781
        %v783 = vsel %vm767, %v754, 0.0
        %784 = vadd.xlane.f32.xlu0 %v783
        %v785 = vpop.xlane.xlu0 %784
        %v786 = vsel %vm767, %v756, 0.0
        %787 = vadd.xlane.f32.xlu0 %v786
        %v788 = vpop.xlane.xlu0 %787
        %v789 = vsel %vm767, %v758, 0.0
        %790 = vadd.xlane.f32.xlu0 %v789
        %v791 = vpop.xlane.xlu0 %790
        %v792 = vrcp.pop %v770
        %v793 = vrcp.pop %v773
        %v794 = vrcp.pop %v776
        %v795 = vrcp.pop %v779
        %v796 = vrcp.pop %v782
        %v797 = vrcp.pop %v785
        %v798 = vrcp.pop %v788
        %v799 = vrcp.pop %v791
        %v800 = vmul.f32 %v720, %v792
        %v801 = vmul.f32 %v722, %v793
        %v802 = vmul.f32 %v724, %v794
        %v803 = vmul.f32 %v726, %v795
        %v804 = vmul.f32 %v728, %v796
        %v805 = vmul.f32 %v730, %v797
        %v806 = vmul.f32 %v732, %v798
        %v807 = vmul.f32 %v734, %v799
        %816 = vrot.lane.b32.xlu0 %v800, 64
        %v817 = vpop.permute.xlu0 %816
        %818 = vrot.lane.b32.xlu0 %v801, 64
        %v819 = vpop.permute.xlu0 %818
        %820 = vrot.lane.b32.xlu0 %v802, 64
        %v821 = vpop.permute.xlu0 %820
        %822 = vrot.lane.b32.xlu0 %v803, 64
        %v823 = vpop.permute.xlu0 %822
        %824 = vrot.lane.b32.xlu0 %v804, 64
        %v825 = vpop.permute.xlu0 %824
        %826 = vrot.lane.b32.xlu0 %v805, 64
        %v827 = vpop.permute.xlu0 %826
        %828 = vrot.lane.b32.xlu0 %v806, 64
        %v829 = vpop.permute.xlu0 %828
        %830 = vrot.lane.b32.xlu0 %v807, 64
        %v831 = vpop.permute.xlu0 %830
        %v840 = vmul.f32 %v616, %v817
        %v841 = vmul.f32 %v619, %v819
        %v842 = vmul.f32 %v624, %v821
        %v843 = vmul.f32 %v627, %v823
        %v844 = vmul.f32 %v632, %v825
        %v845 = vmul.f32 %v635, %v827
        %v846 = vmul.f32 %v640, %v829
        %v847 = vmul.f32 %v643, %v831
        %v848 = vadd.f32 %v840, %v655
        %v849 = vadd.f32 %v841, %v657
        %v850 = vadd.f32 %v842, %v659
        %v851 = vadd.f32 %v843, %v661
        %v852 = vadd.f32 %v844, %v663
        %v853 = vadd.f32 %v845, %v665
        %v854 = vadd.f32 %v846, %v667
        %v855 = vadd.f32 %v847, %v669
        %v856 = vpack.c.bf16 %v849, %v848
        %v857 = vpack.c.bf16 %v851, %v850
        %v858 = vpack.c.bf16 %v853, %v852
        %v859 = vpack.c.bf16 %v855, %v854
        %s860 = scalar_lea.vmem %s231, 64 [#allocation2]
        %v861 = vld [vmem:[%s860] sm:$0xf]
        %v862 = vld [vmem:[%s860 + $0x4] sm:$0xf]
        %v863 = vld [vmem:[%s860 + $0x8] sm:$0xf]
        %v864 = vld [vmem:[%s860 + $0xc] sm:$0xf]
        %v865 = vld [vmem:[%s282 + $0x1] sm:$0x1]
        %v866 = vlaneseq
        %v867 = vshrl.u32 %v866, 7
        %v868 = vsub.s32 0, %v867
        %v869 = vrot.slane %v865, %v868
        %874 = vrot.lane.b32.xlu0 %v856, 32
        %v875 = vpop.permute.xlu0 %874
        %876 = vrot.lane.b32.xlu0 %v857, 32
        %v877 = vpop.permute.xlu0 %876
        %878 = vrot.lane.b32.xlu0 %v858, 32
        %v879 = vpop.permute.xlu0 %878
        %880 = vrot.lane.b32.xlu0 %v859, 32
        %v881 = vpop.permute.xlu0 %880
        %v886 = vunpack.c.l.b16 %v861
        %v887 = vunpack.c.l.b16 %v862
        %v888 = vunpack.c.l.b16 %v863
        %v889 = vunpack.c.l.b16 %v864
        %v890 = vpack.c.b16 %v887, %v886
        %v891 = vpack.c.b16 %v889, %v888
        %v895 = vsel %vm767, %v875, 0
        %v898 = vsel %vm767, %v877, 0
        %v901 = vsel %vm767, %v879, 0
        %v904 = vsel %vm767, %v881, 0
        %906 = vmatprep.subr.bf16.mxu0 0
        %907 = vmatpush1.bf16.msra.mxu0 0
        %908 = vmatprep.subr.bf16.mxu0 0
        %909 = vmatpush1.bf16.msra.mxu0 0
        %910 = vmatprep.subr.bf16.mxu0 0
        %911 = vmatpush1.bf16.msra.mxu0 0
        %912 = vmatprep.subr.bf16.mxu0 0
        %913 = vmatpush1.bf16.msra.mxu0 0
        %914 = vmatprep.subr.bf16.mxu0 0
        %915 = vmatpush1.bf16.msra.mxu0 0
        %916 = vmatprep.subr.bf16.mxu0 0
        %917 = vmatpush1.bf16.msra.mxu0 0
        %918 = vmatprep.subr.bf16.mxu0 0
        %919 = vmatpush1.bf16.msra.mxu0 %v891
        %920 = vmatprep.subr.bf16.mxu0 0
        %921 = vmatpush1.bf16.msra.mxu0 %v890
        %922 = vmatprep.subr.bf16.mxu0 0
        %923 = vmatpush2.bf16.msra.mxu0 0
        %924 = vmatprep.subr.bf16.mxu0 0
        %925 = vmatpush2.bf16.msra.mxu0 0
        %926 = vmatprep.subr.bf16.mxu0 0
        %927 = vmatpush2.bf16.msra.mxu0 0
        %928 = vmatprep.subr.bf16.mxu0 0
        %929 = vmatpush2.bf16.msra.mxu0 0
        %930 = vmatprep.subr.bf16.mxu0 0
        %931 = vmatpush2.bf16.msra.mxu0 0
        %932 = vmatprep.subr.bf16.mxu0 0
        %933 = vmatpush2.bf16.msra.mxu0 0
        %934 = vmatprep.subr.bf16.mxu0 0
        %935 = vmatpush2.bf16.msra.mxu0 0
        %936 = vmatprep.subr.bf16.mxu0 0
        %937 = vmatpush2.bf16.msra.mxu0 0
        %938 = vmatprep.mubr.bf16.mxu0 0
        %939 = vmatmul.mubr.bf16.gmra.mxu0 %v895
        %v940 = vpop.f32.mrf.mxu0
        %v941 = vadd.f32 %v869, %v940
        %v942 = vpop.f32.mrf.mxu0
        %v943 = vpop.f32.mrf.mxu0
        %v944 = vadd.f32 %v869, %v943
        %v945 = vpop.f32.mrf.mxu0
        %946 = vmatprep.mubr.bf16.mxu0 0
        %947 = vmatmul.mubr.bf16.gmra.mxu0 %v898
        %v948 = vpop.f32.mrf.mxu0
        %v949 = vadd.f32 %v869, %v948
        %v950 = vpop.f32.mrf.mxu0
        %v951 = vpop.f32.mrf.mxu0
        %v952 = vadd.f32 %v869, %v951
        %v953 = vpop.f32.mrf.mxu0
        %954 = vmatprep.mubr.bf16.mxu0 0
        %955 = vmatmul.mubr.bf16.gmra.mxu0 %v901
        %v956 = vpop.f32.mrf.mxu0
        %v957 = vadd.f32 %v869, %v956
        %v958 = vpop.f32.mrf.mxu0
        %v959 = vpop.f32.mrf.mxu0
        %v960 = vadd.f32 %v869, %v959
        %v961 = vpop.f32.mrf.mxu0
        %962 = vmatprep.mubr.bf16.mxu0 0
        %963 = vmatmul.mubr.bf16.gmra.mxu0 %v904
        %v964 = vpop.f32.mrf.mxu0
        %v965 = vadd.f32 %v869, %v964
        %v966 = vpop.f32.mrf.mxu0
        %v967 = vpop.f32.mrf.mxu0
        %v968 = vadd.f32 %v869, %v967
        %v969 = vpop.f32.mrf.mxu0
        %970 = vdwg.mxu0
        %v971 = vmax.f32 %v941, 0.0
        %v972 = vmax.f32 %v944, 0.0
        %v973 = vmax.f32 %v949, 0.0
        %v974 = vmax.f32 %v952, 0.0
        %v975 = vmax.f32 %v957, 0.0
        %v976 = vmax.f32 %v960, 0.0
        %v977 = vmax.f32 %v965, 0.0
        %v978 = vmax.f32 %v968, 0.0
        %v979 = vpack.c.bf16 %v972, %v971
        %v980 = vpack.c.bf16 %v974, %v973
        %v981 = vpack.c.bf16 %v976, %v975
        %v982 = vpack.c.bf16 %v978, %v977
        %s983 = scalar_lea.vmem %s231, 128 [#allocation2]
        %v984 = vld [vmem:[%s983] sm:$0xf]
        %v985 = vld [vmem:[%s983 + $0x4] sm:$0xf]
        %v986 = vld [vmem:[%s983 + $0x8] sm:$0xf]
        %v987 = vld [vmem:[%s983 + $0xc] sm:$0xf]
        %v988 = vld [vmem:[%s983 + $0x10] sm:$0xf]
        %v989 = vld [vmem:[%s983 + $0x14] sm:$0xf]
        %v990 = vld [vmem:[%s983 + $0x18] sm:$0xf]
        %v991 = vld [vmem:[%s983 + $0x1c] sm:$0xf]
        %v992 = vld [vmem:[%s983 + $0x20] sm:$0xf]
        %v993 = vld [vmem:[%s983 + $0x24] sm:$0xf]
        %v994 = vld [vmem:[%s983 + $0x28] sm:$0xf]
        %v995 = vld [vmem:[%s983 + $0x2c] sm:$0xf]
        %v996 = vld [vmem:[%s983 + $0x30] sm:$0xf]
        %v997 = vld [vmem:[%s983 + $0x34] sm:$0xf]
        %v998 = vld [vmem:[%s983 + $0x38] sm:$0xf]
        %v999 = vld [vmem:[%s983 + $0x3c] sm:$0xf]
        %v1000 = vld [vmem:[%s282 + $0x2] sm:$0x1]
        %v1001 = vlaneseq
        %v1002 = vshrl.u32 %v1001, 7
        %v1003 = vsub.s32 0, %v1002
        %v1004 = vrot.slane %v1000, %v1003
        %v1021 = vunpack.c.l.b16 %v984
        %v1022 = vunpack.c.l.b16 %v985
        %v1023 = vunpack.c.l.b16 %v986
        %v1024 = vunpack.c.l.b16 %v987
        %v1025 = vunpack.c.l.b16 %v988
        %v1026 = vunpack.c.l.b16 %v989
        %v1027 = vunpack.c.l.b16 %v990
        %v1028 = vunpack.c.l.b16 %v991
        %v1029 = vunpack.c.l.b16 %v992
        %v1030 = vunpack.c.l.b16 %v993
        %v1031 = vunpack.c.l.b16 %v994
        %v1032 = vunpack.c.l.b16 %v995
        %v1033 = vunpack.c.l.b16 %v996
        %v1034 = vunpack.c.l.b16 %v997
        %v1035 = vunpack.c.l.b16 %v998
        %v1036 = vunpack.c.l.b16 %v999
        %v1037 = vpack.c.b16 %v1022, %v1021
        %v1038 = vpack.c.b16 %v1024, %v1023
        %v1039 = vpack.c.b16 %v1026, %v1025
        %v1040 = vpack.c.b16 %v1028, %v1027
        %v1041 = vpack.c.b16 %v1030, %v1029
        %v1042 = vpack.c.b16 %v1032, %v1031
        %v1043 = vpack.c.b16 %v1034, %v1033
        %v1044 = vpack.c.b16 %v1036, %v1035
        %1053 = vmatprep.subr.bf16.mxu0 0
        %1054 = vmatpush1.bf16.msra.mxu0 %v1044
        %1055 = vmatprep.subr.bf16.mxu0 0
        %1056 = vmatpush1.bf16.msra.mxu0 %v1043
        %1057 = vmatprep.subr.bf16.mxu0 0
        %1058 = vmatpush1.bf16.msra.mxu0 %v1042
        %1059 = vmatprep.subr.bf16.mxu0 0
        %1060 = vmatpush1.bf16.msra.mxu0 %v1041
        %1061 = vmatprep.subr.bf16.mxu0 0
        %1062 = vmatpush1.bf16.msra.mxu0 %v1040
        %1063 = vmatprep.subr.bf16.mxu0 0
        %1064 = vmatpush1.bf16.msra.mxu0 %v1039
        %1065 = vmatprep.subr.bf16.mxu0 0
        %1066 = vmatpush1.bf16.msra.mxu0 %v1038
        %1067 = vmatprep.subr.bf16.mxu0 0
        %1068 = vmatpush1.bf16.msra.mxu0 %v1037
        %1069 = vmatprep.subr.bf16.mxu0 0
        %1070 = vmatpush2.bf16.msra.mxu0 0
        %1071 = vmatprep.subr.bf16.mxu0 0
        %1072 = vmatpush2.bf16.msra.mxu0 0
        %1073 = vmatprep.subr.bf16.mxu0 0
        %1074 = vmatpush2.bf16.msra.mxu0 0
        %1075 = vmatprep.subr.bf16.mxu0 0
        %1076 = vmatpush2.bf16.msra.mxu0 0
        %1077 = vmatprep.subr.bf16.mxu0 0
        %1078 = vmatpush2.bf16.msra.mxu0 0
        %1079 = vmatprep.subr.bf16.mxu0 0
        %1080 = vmatpush2.bf16.msra.mxu0 0
        %1081 = vmatprep.subr.bf16.mxu0 0
        %1082 = vmatpush2.bf16.msra.mxu0 0
        %1083 = vmatprep.subr.bf16.mxu0 0
        %1084 = vmatpush2.bf16.msra.mxu0 0
        %1085 = vmatprep.mubr.bf16.mxu0 0
        %1086 = vmatmul.mubr.bf16.gmra.mxu0 %v979
        %v1087 = vpop.f32.mrf.mxu0
        %v1088 = vadd.f32 %v1004, %v1087
        %v1089 = vpop.f32.mrf.mxu0
        %v1090 = vpop.f32.mrf.mxu0
        %v1091 = vadd.f32 %v1004, %v1090
        %v1092 = vpop.f32.mrf.mxu0
        %1093 = vmatprep.mubr.bf16.mxu0 0
        %1094 = vmatmul.mubr.bf16.gmra.mxu0 %v980
        %v1095 = vpop.f32.mrf.mxu0
        %v1096 = vadd.f32 %v1004, %v1095
        %v1097 = vpop.f32.mrf.mxu0
        %v1098 = vpop.f32.mrf.mxu0
        %v1099 = vadd.f32 %v1004, %v1098
        %v1100 = vpop.f32.mrf.mxu0
        %1101 = vmatprep.mubr.bf16.mxu0 0
        %1102 = vmatmul.mubr.bf16.gmra.mxu0 %v981
        %v1103 = vpop.f32.mrf.mxu0
        %v1104 = vadd.f32 %v1004, %v1103
        %v1105 = vpop.f32.mrf.mxu0
        %v1106 = vpop.f32.mrf.mxu0
        %v1107 = vadd.f32 %v1004, %v1106
        %v1108 = vpop.f32.mrf.mxu0
        %1109 = vmatprep.mubr.bf16.mxu0 0
        %1110 = vmatmul.mubr.bf16.gmra.mxu0 %v982
        %v1111 = vpop.f32.mrf.mxu0
        %v1112 = vadd.f32 %v1004, %v1111
        %v1113 = vpop.f32.mrf.mxu0
        %v1114 = vpop.f32.mrf.mxu0
        %v1115 = vadd.f32 %v1004, %v1114
        %v1116 = vpop.f32.mrf.mxu0
        %1117 = vdwg.mxu0
        %v1118 = vpack.c.bf16 %v1091, %v1088
        %v1119 = vpack.c.bf16 %v1099, %v1096
        %v1120 = vpack.c.bf16 %v1107, %v1104
        %v1121 = vpack.c.bf16 %v1115, %v1112
        %v1126 = vunpack.c.l.b16 %v1118
        %v1127 = vunpack.c.h.b16 %v1118
        %v1128 = vunpack.c.l.b16 %v1119
        %v1129 = vunpack.c.h.b16 %v1119
        %v1130 = vunpack.c.l.b16 %v1120
        %v1131 = vunpack.c.h.b16 %v1120
        %v1132 = vunpack.c.l.b16 %v1121
        %v1133 = vunpack.c.h.b16 %v1121
        %v1134 = vpack.c.b16 %v1126, %v1126
        %v1135 = vpack.c.b16 %v1127, %v1127
        %v1136 = vpack.c.b16 %v1128, %v1128
        %v1137 = vpack.c.b16 %v1129, %v1129
        %v1138 = vpack.c.b16 %v1130, %v1130
        %v1139 = vpack.c.b16 %v1131, %v1131
        %v1140 = vpack.c.b16 %v1132, %v1132
        %v1141 = vpack.c.b16 %v1133, %v1133
        %1150 = vst [vmem:[%s268] sm:$0xf] %v1134
        %1151 = vst [vmem:[%s268 + $0x4] sm:$0xf] %v1135
        %1152 = vst [vmem:[%s268 + $0x8] sm:$0xf] %v1136
        %1153 = vst [vmem:[%s268 + $0xc] sm:$0xf] %v1137
        %1154 = vst [vmem:[%s268 + $0x10] sm:$0xf] %v1138
        %1155 = vst [vmem:[%s268 + $0x14] sm:$0xf] %v1139
        %1156 = vst [vmem:[%s268 + $0x18] sm:$0xf] %v1140
        %1157 = vst [vmem:[%s268 + $0x1c] sm:$0xf] %v1141
        %s1158 = sand.u32 %s144, 1
        %s1159 = scalar_lea.sflag [#allocation4], %s1158
        %s1160 = sand.u32 %s144, 1
        %s1161 = smul.addr %s1160, 32
        %s1162 = scalar_lea.vmem [#allocation5], %s1161
        // Predicated region
        $region41: #{tpu_custom_call.1} parent=35 // pred_check
          %p1163 = pneg %p154
        $region42: #{tpu_custom_call.1} parent=35 // pred_check_branch
          %1165 = sbr.rel (%p1163) target = $region44
        $region43: #{tpu_custom_call.1} parent=35 // pred_region
          %s1166 = smul.u32 8, %s26
          %s1168 = ssub.s32 512, 512
          %1169 = vsyncadd %s1159, %s1168
          %s1170 = smul.addr %s25, 8
          %s1171 = sadd.s32 %s1166, %s1170
          %s1172 = smul.addr %s1171, 64
          %s1173 = scalar_lea.hbm %s4, %s1172
          %s1174 = sshll.u32 %s1162, 4
          %s1175 = int_to_ptr.vmem [resolvable:$true] %s1174
          %1180 = dma.vmem_to_hbm [thread:$0]  %s1175, 512, %s1173, %s1159, 64, 64, 4
        $region44: #{tpu_custom_call.1} parent=35 // pred_fallthru
          _
      $region36: #{tpu_custom_call.1} parent=5 // pred_fallthru
        _
      %p1181 = scmp.le.s32.totalorder 2, %s16
      // Predicated region
      $region45: #{tpu_custom_call.1} parent=5 // pred_check
        %p1182 = pneg %p1181
      $region46: #{tpu_custom_call.1} parent=5 // pred_check_branch
        %1184 = sbr.rel (%p1182) target = $region48
      $region47: #{tpu_custom_call.1} parent=5 // pred_region
        %s1185 = ssub.s32 %s16, 2
        // Predicated region
        $region49: #{tpu_custom_call.1} parent=47 // pred_check
          %p1186 = pneg %p160
        $region50: #{tpu_custom_call.1} parent=47 // pred_check_branch
          %1188 = sbr.rel (%p1186) target = $region52
        $region51: #{tpu_custom_call.1} parent=47 // pred_region
          %s1189 = sand.u32 %s145, 1
          %s1190 = scalar_lea.sflag [#allocation4], %s1189
          %s1191 = sand.u32 %s145, 1
          %s1192 = smul.addr %s1191, 32
          %s1193 = scalar_lea.vmem [#allocation5], %s1192
          %1194 = dma.done %s1190, 512
        $region52: #{tpu_custom_call.1} parent=47 // pred_fallthru
          _
      $region48: #{tpu_custom_call.1} parent=5 // pred_fallthru
        _
    $region6: #{tpu_custom_call.1} parent=1 // loop_footer
      %s20 = sadd.s32 1, %s16
    $region7: #{tpu_custom_call.1} parent=1 // loop_footer_branch
      %15 = sbr.rel target = $region3
    $region8: #{tpu_custom_call.1} parent=1 // loop_exit
      _
    %1195 = vsyncpa [#allocation3], 1
    %s1196 = scalar_lea.sflag [#allocation3], 1
    %1197 = vsyncpa %s1196, 1
    %1198 = vsyncpa [#allocation4], 1
    %s1199 = scalar_lea.sflag [#allocation4], 1
    %1200 = vsyncpa %s1199, 1

</llo_original>
